<compile_context>
chip_gen: v7x
topology: tpu7x:2x2x1
jax: 0.10.0
libtpu: 0.0.40
codegen_flags: <defaults>
</compile_context>

<pallas_src>
import jax
import jax.numpy as jnp
from jax.experimental import pallas as pl
from jax.experimental.pallas import tpu as pltpu


# ----------------------------------------------------------------------------- kernel
def _mlp_kernel(x_ref, w1_ref, b1_ref, w2_ref, b2_ref, o_ref):
    # fc1 on the MXU: cast the streamed f32 tile to bf16 in-kernel (VPU work hidden
    # under MXU/DMA), f32 accumulation.
    x_bf = x_ref[...].astype(jnp.bfloat16)
    h = jnp.dot(x_bf, w1_ref[...], preferred_element_type=jnp.float32)
    h = h + b1_ref[...]                                   # f32 bias add (VPU)
    # sigmoid(h) == 0.5 * tanh(0.5*h) + 0.5 : single EUP op per element.
    h = 0.5 * jnp.tanh(0.5 * h) + 0.5
    # fc2 on the MXU over the padded, lane-dense class dim.
    logits = jnp.dot(h.astype(jnp.bfloat16), w2_ref[...],
                     preferred_element_type=jnp.float32)
    logits = logits + b2_ref[...]                         # padded columns carry -1e30 bias
    # Numerically stable softmax over the (padded) class dim; padded exp() == 0.
    m = jnp.max(logits, axis=-1, keepdims=True)
    e = jnp.exp(logits - m)
    denom = jnp.sum(e, axis=-1, keepdims=True)
    inv = pl.reciprocal(denom, approx=False)              # exact: row sums stay 1
    o_ref[...] = (e * inv).astype(o_ref.dtype)


# ------------------------------------------------------------------- generation-aware knobs
def _tpu_budget():
    """Return (big_vmem, vmem_limit_bytes) based on physical VMEM capacity."""
    try:
        cap = int(pltpu.get_tpu_info().vmem_capacity_bytes)
    except Exception:
        cap = 64 * 1024 * 1024                            # conservative: assume v7x-class
    big = cap >= 96 * 1024 * 1024                         # v5e/v6e: 128 MiB; v7x: 64 MiB
    limit = (96 if big else 48) * 1024 * 1024
    return big, limit


def _default_block_batch(batch, big_vmem):
    cap = 1024 if big_vmem else 512                       # bigger tiles where VMEM allows
    # Aim for >= ~8 grid steps (v7x megacore sharding + pipeline overlap) while
    # amortizing the ~0.35us/step overhead.
    target = ((-(-batch // 8) + 15) // 16) * 16
    return max(16, min(cap, target))


# -------------------------------------------------------------------------- weight prep
def prepare_params(w1, b1, w2, b2):
    """One-time (hoistable) weight prep: bf16 cast + 128-padding of H and C.

    w1: [D, H], b1: [H], w2: [H, C], b2: [C]  (weights already transposed vs. torch).
    """
    D, H = w1.shape
    C = w2.shape[1]
    H_pad = pl.cdiv(H, 128) * 128
    C_pad = pl.cdiv(C, 128) * 128
    w1_p = jnp.zeros((D, H_pad), jnp.bfloat16).at[:, :H].set(w1.astype(jnp.bfloat16))
    b1_p = jnp.zeros((1, H_pad), jnp.float32).at[0, :H].set(b1.astype(jnp.float32))
    w2_p = jnp.zeros((H_pad, C_pad), jnp.bfloat16).at[:H, :C].set(w2.astype(jnp.bfloat16))
    # Padded classes get a huge negative bias so their softmax exp() underflows to 0.
    b2_p = jnp.full((1, C_pad), -1e30, jnp.float32).at[0, :C].set(b2.astype(jnp.float32))
    return {"w1": w1_p, "b1": b1_p, "w2": w2_p, "b2": b2_p,
            "input_size": D, "num_classes": C}


# ----------------------------------------------------------------------------- forward
def feedforward_nn_prepared(x, params, *, block_batch=None, out_dtype=None):
    """x: [B, D] (f32 or bf16); params from prepare_params() -> [B, C]."""
    B, D = x.shape
    w1, b1, w2, b2 = params["w1"], params["b1"], params["w2"], params["b2"]
    C = params["num_classes"]
    assert params["input_size"] == D
    H_pad = w1.shape[1]
    C_pad = w2.shape[1]
    out_dtype = x.dtype if out_dtype is None else out_dtype

    big_vmem, vmem_limit = _tpu_budget()

    if block_batch is None:
        block_batch = _default_block_batch(B, big_vmem)
    block_batch = max(8, min(int(block_batch), B))
    # 16-row alignment (bf16 [16,128] vreg packing); fall back to the f32 minimum of 8.
    block_batch = (block_batch // 16) * 16 if block_batch >= 16 else 8
    n_blocks = pl.cdiv(B, block_batch)

    resident = pl.Buffered(buffer_count=1)                # constant index_map -> single-buffer

    out = pl.pallas_call(
        _mlp_kernel,
        out_shape=jax.ShapeDtypeStruct((B, C_pad), out_dtype),
        grid_spec=pltpu.PrefetchScalarGridSpec(
            num_scalar_prefetch=0,
            grid=(n_blocks,),
            in_specs=[
                pl.BlockSpec((block_batch, D), lambda i: (i, 0)),                    # x tile (pipelined)
                pl.BlockSpec((D, H_pad), lambda i: (0, 0), pipeline_mode=resident),  # W1 (resident)
                pl.BlockSpec((1, H_pad), lambda i: (0, 0), pipeline_mode=resident),  # b1
                pl.BlockSpec((H_pad, C_pad), lambda i: (0, 0), pipeline_mode=resident),  # W2
                pl.BlockSpec((1, C_pad), lambda i: (0, 0), pipeline_mode=resident),  # b2
            ],
            out_specs=pl.BlockSpec((block_batch, C_pad), lambda i: (i, 0)),
        ),
        compiler_params=pltpu.CompilerParams(
            dimension_semantics=("parallel",),             # batch tiles shard across TCs on v7x
            vmem_limit_bytes=vmem_limit,
        ),
    )(x, w1, b1, w2, b2)

    # Only unpad the class dim when needed (no batch unpadding pass at all).
    if C_pad != C:
        out = out[:, :C]
    return out


def feedforward_nn(x, w1, b1, w2, b2, *, block_batch=None, out_dtype=None):
    """Convenience wrapper; for repeated calls, call prepare_params() once instead."""
    params = prepare_params(w1, b1, w2, b2)
    return feedforward_nn_prepared(x, params, block_batch=block_batch, out_dtype=out_dtype)


# ------------------------------------------------------------------------------- demo
def _torch_linear_init(key, fan_in, fan_out):
    """nn.Linear-style U(-1/sqrt(fan_in), 1/sqrt(fan_in)); weight pre-transposed."""
    kw, kb = jax.random.split(key)
    bound = 1.0 / jnp.sqrt(jnp.float32(fan_in))
    w = jax.random.uniform(kw, (fan_in, fan_out), jnp.float32, -bound, bound)
    b = jax.random.uniform(kb, (fan_out,), jnp.float32, -bound, bound)
    return w, b


def _reference(x, w1, b1, w2, b2):
    h = jax.nn.sigmoid(x @ w1 + b1)
    return jax.nn.softmax(h @ w2 + b2, axis=-1)


if __name__ == "__main__":
    key = jax.random.PRNGKey(0)

    # Case 1: shapes matching the PyTorch module demo (tiny).
    batch, input_size, hidden_size, num_classes = 8, 32, 32, 16
    kx, k1, k2, key = jax.random.split(key, 4)
    x = jax.random.normal(kx, (batch, input_size), jnp.float32)
    w1, b1 = _torch_linear_init(k1, input_size, hidden_size)
    w2, b2 = _torch_linear_init(k2, hidden_size, num_classes)

    params = prepare_params(w1, b1, w2, b2)                # hoisted one-time weight prep
    out = jax.block_until_ready(feedforward_nn_prepared(x, params))
    ref = _reference(x, w1, b1, w2, b2)
    assert out.shape == (batch, num_classes)
    assert jnp.allclose(out, ref, atol=5e-3, rtol=5e-2), "mismatch vs reference (case 1)"
    assert jnp.allclose(jnp.sum(out, axis=-1), 1.0, atol=1e-4), "softmax rows must sum to 1 (case 1)"

    # Case 2: exercises batch tiling (grid > 1), partial last block, and H/C padding.
    batch, input_size, hidden_size, num_classes = 200, 32, 64, 10
    kx, k1, k2, key = jax.random.split(key, 4)
    x = jax.random.normal(kx, (batch, input_size), jnp.float32)
    w1, b1 = _torch_linear_init(k1, input_size, hidden_size)
    w2, b2 = _torch_linear_init(k2, hidden_size, num_classes)

    params = prepare_params(w1, b1, w2, b2)
    out = jax.block_until_ready(feedforward_nn_prepared(x, params, block_batch=64))
    ref = _reference(x, w1, b1, w2, b2)
    assert out.shape == (batch, num_classes)
    assert jnp.allclose(out, ref, atol=5e-3, rtol=5e-2), "mismatch vs reference (case 2)"
    assert jnp.allclose(jnp.sum(out, axis=-1), 1.0, atol=1e-4), "softmax rows must sum to 1 (case 2)"

    print("KERNEL_OK")
</pallas_src>

<mosaic_0001>
module attributes {stable_mosaic.version = 11 : i64} {
  func.func @_mlp_kernel(%arg0: i32, %arg1: memref<8x32xf32, #tpu.memory_space<vmem>>, %arg2: memref<32x128xbf16, #tpu.memory_space<vmem>>, %arg3: memref<1x128xf32, #tpu.memory_space<vmem>>, %arg4: memref<128x128xbf16, #tpu.memory_space<vmem>>, %arg5: memref<1x128xf32, #tpu.memory_space<vmem>>, %arg6: memref<8x128xf32, #tpu.memory_space<vmem>>) attributes {dimension_semantics = [#tpu.dimension_semantics<parallel>], iteration_bounds = array<i64: 1>, scalar_prefetch = 0 : i64, scratch_operands = 0 : i64, tpu.core_type = #tpu.core_type<tc>, window_params = [{transform_indices = @transform_0, window_bounds = array<i64: 8, 32>}, {pipeline_mode = #tpu.pipeline_mode<synchronous>, transform_indices = @transform_1, window_bounds = array<i64: 32, 128>}, {pipeline_mode = #tpu.pipeline_mode<synchronous>, transform_indices = @transform_2, window_bounds = array<i64: 1, 128>}, {pipeline_mode = #tpu.pipeline_mode<synchronous>, transform_indices = @transform_3, window_bounds = array<i64: 128, 128>}, {pipeline_mode = #tpu.pipeline_mode<synchronous>, transform_indices = @transform_4, window_bounds = array<i64: 1, 128>}, {transform_indices = @transform_5, window_bounds = array<i64: 8, 128>}]} {
    %c0 = arith.constant 0 : index
    %c0_0 = arith.constant 0 : index
    %0 = vector.load %arg1[%c0, %c0_0] : memref<8x32xf32, #tpu.memory_space<vmem>>, vector<8x32xf32>
    %1 = arith.truncf %0 : vector<8x32xf32> to vector<8x32xbf16>
    %c0_1 = arith.constant 0 : index
    %c0_2 = arith.constant 0 : index
    %2 = vector.load %arg2[%c0_1, %c0_2] : memref<32x128xbf16, #tpu.memory_space<vmem>>, vector<32x128xbf16>
    %cst = arith.constant dense<0.000000e+00> : vector<8x128xf32>
    %3 = tpu.matmul %1, %2, %cst {dimension_numbers = #tpu.dot_dimension_numbers<[1], [0], [0], [1], [0, 0, 1, 1], [], []>} : vector<8x32xbf16>, vector<32x128xbf16>, vector<8x128xf32> -> vector<8x128xf32>
    %c0_3 = arith.constant 0 : index
    %c0_4 = arith.constant 0 : index
    %4 = vector.load %arg3[%c0_3, %c0_4] : memref<1x128xf32, #tpu.memory_space<vmem>>, vector<1x128xf32>
    %5 = vector.broadcast %4 : vector<1x128xf32> to vector<8x128xf32>
    %6 = arith.addf %3, %5 : vector<8x128xf32>
    %cst_5 = arith.constant 5.000000e-01 : f32
    %7 = vector.broadcast %cst_5 : f32 to vector<8x128xf32>
    %8 = arith.mulf %7, %6 : vector<8x128xf32>
    %9 = math.tanh %8 : vector<8x128xf32>
    %cst_6 = arith.constant 5.000000e-01 : f32
    %10 = vector.broadcast %cst_6 : f32 to vector<8x128xf32>
    %11 = arith.mulf %10, %9 : vector<8x128xf32>
    %cst_7 = arith.constant 5.000000e-01 : f32
    %12 = vector.broadcast %cst_7 : f32 to vector<8x128xf32>
    %13 = arith.addf %11, %12 : vector<8x128xf32>
    %14 = arith.truncf %13 : vector<8x128xf32> to vector<8x128xbf16>
    %c0_8 = arith.constant 0 : index
    %c0_9 = arith.constant 0 : index
    %15 = vector.load %arg4[%c0_8, %c0_9] : memref<128x128xbf16, #tpu.memory_space<vmem>>, vector<128x128xbf16>
    %cst_10 = arith.constant dense<0.000000e+00> : vector<8x128xf32>
    %16 = tpu.matmul %14, %15, %cst_10 {dimension_numbers = #tpu.dot_dimension_numbers<[1], [0], [0], [1], [0, 0, 1, 1], [], []>} : vector<8x128xbf16>, vector<128x128xbf16>, vector<8x128xf32> -> vector<8x128xf32>
    %c0_11 = arith.constant 0 : index
    %c0_12 = arith.constant 0 : index
    %17 = vector.load %arg5[%c0_11, %c0_12] : memref<1x128xf32, #tpu.memory_space<vmem>>, vector<1x128xf32>
    %18 = vector.broadcast %17 : vector<1x128xf32> to vector<8x128xf32>
    %19 = arith.addf %16, %18 : vector<8x128xf32>
    %cst_13 = arith.constant dense<0xFF800000> : vector<8xf32>
    %20 = vector.multi_reduction <maximumf>, %19, %cst_13 [1] : vector<8x128xf32> to vector<8xf32>
    %21 = vector.shape_cast %20 : vector<8xf32> to vector<8x1xf32>
    %22 = vector.broadcast %21 : vector<8x1xf32> to vector<8x128xf32>
    %23 = arith.subf %19, %22 : vector<8x128xf32>
    %24 = math.exp %23 : vector<8x128xf32>
    %cst_14 = arith.constant dense<0.000000e+00> : vector<8xf32>
    %25 = vector.multi_reduction <add>, %24, %cst_14 [1] : vector<8x128xf32> to vector<8xf32>
    %26 = vector.shape_cast %25 : vector<8xf32> to vector<8x1xf32>
    %27 = tpu.reciprocal %26 : vector<8x1xf32> -> vector<8x1xf32>
    %28 = vector.broadcast %27 : vector<8x1xf32> to vector<8x128xf32>
    %29 = arith.mulf %24, %28 : vector<8x128xf32>
    %c0_15 = arith.constant 0 : index
    %c0_16 = arith.constant 0 : index
    %30 = vector.load %arg6[%c0_15, %c0_16] : memref<8x128xf32, #tpu.memory_space<vmem>>, vector<8x128xf32>
    tpu.vector_store %arg6[%c0_15, %c0_16], %29 {strides = array<i32>} : memref<8x128xf32, #tpu.memory_space<vmem>>, vector<8x128xf32>,
    return
  }
  func.func @transform_0(%arg0: i32) -> (i32, i32) {
    %c0_i32 = arith.constant 0 : i32
    %c0_i32_0 = arith.constant 0 : i32
    return %arg0, %c0_i32 : i32, i32
  }
  func.func @transform_1(%arg0: i32) -> (i32, i32) {
    %c0_i32 = arith.constant 0 : i32
    %c0_i32_0 = arith.constant 0 : i32
    %c0_i32_1 = arith.constant 0 : i32
    return %c0_i32, %c0_i32_0 : i32, i32
  }
  func.func @transform_2(%arg0: i32) -> (i32, i32) {
    %c0_i32 = arith.constant 0 : i32
    %c0_i32_0 = arith.constant 0 : i32
    %c0_i32_1 = arith.constant 0 : i32
    return %c0_i32, %c0_i32_0 : i32, i32
  }
  func.func @transform_3(%arg0: i32) -> (i32, i32) {
    %c0_i32 = arith.constant 0 : i32
    %c0_i32_0 = arith.constant 0 : i32
    %c0_i32_1 = arith.constant 0 : i32
    return %c0_i32, %c0_i32_0 : i32, i32
  }
  func.func @transform_4(%arg0: i32) -> (i32, i32) {
    %c0_i32 = arith.constant 0 : i32
    %c0_i32_0 = arith.constant 0 : i32
    %c0_i32_1 = arith.constant 0 : i32
    return %c0_i32, %c0_i32_0 : i32, i32
  }
  func.func @transform_5(%arg0: i32) -> (i32, i32) {
    %c0_i32 = arith.constant 0 : i32
    %c0_i32_0 = arith.constant 0 : i32
    return %arg0, %c0_i32 : i32, i32
  }
}

</mosaic_0001>

<llo_original>
// kernel: tpu_custom_call.1
$region0: #{tpu_custom_call.1}
  #allocation0 [shape = 'u32[]', space=smem, size = 0x4, offset = 0x4, fixed_abs, tag = 'smem constant byte address 0x4 - core index']
  #allocation1 [shape = 'u32[144,128]{1,0:T(1,128)}', space=vmem, size = 0x12000, scoped, tag = 'internal scratch']
  %s0 = inlined_call_operand.hbm [shape: f32[8,32], index: 0, kind: input, shape index: {}]
  %s1 = inlined_call_operand.hbm [shape: bf16[32,128], index: 1, kind: input, shape index: {}]
  %s2 = inlined_call_operand.vmem [shape: f32[1,128], index: 2, kind: input, shape index: {}]
  %s3 = inlined_call_operand.hbm [shape: bf16[128,128], index: 3, kind: input, shape index: {}]
  %s4 = inlined_call_operand.vmem [shape: f32[1,128], index: 4, kind: input, shape index: {}]
  %s5 = inlined_call_operand.hbm [shape: f32[8,128], index: 5, kind: output, shape index: {}]
  %s6 = sld [smem:[#allocation0]]
  $region42: #{tpu_custom_call.1} parent=0
    _
  %s8 = ssub.s32 1, %s6
  %s9 = scalar_select 0, %s8, %s6
  $region1: #{tpu_custom_call.1} parent=0
    #allocation2 [shape = 'u8[4096]{0}', space=vmem, size = 0x1000, scoped, tag = 'input window, operand 0, single buffered']
    #allocation3 [shape = 's32[1]{0}', space=sflag, size = 0x4, scoped, tag = 'scoped memory for tpu_custom_call.1']
    #allocation4 [shape = 's32[1]{0}', space=sflag, size = 0x4, scoped, tag = 'scoped memory for tpu_custom_call.1']
    #allocation5 [shape = 'u8[8192]{0}', space=vmem, size = 0x2000, scoped, tag = 'input window, operand 1, single buffered']
    #allocation6 [shape = 's32[1]{0}', space=sflag, size = 0x4, scoped, tag = 'scoped memory for tpu_custom_call.1']
    #allocation7 [shape = 'u8[32768]{0}', space=vmem, size = 0x8000, scoped, tag = 'input window, operand 3, single buffered']
    #allocation8 [shape = 'u8[4096]{0}', space=vmem, size = 0x1000, scoped, tag = 'output window, operand 0, single buffered']
    %10 = vsyncpa [#allocation3], 0
    %11 = vsyncpa [#allocation6], 0
    %12 = vsyncpa [#allocation4], 0
    // Predicated region
    $region2: #{tpu_custom_call.1} parent=1 // pred_check
      _
    $region3: #{tpu_custom_call.1} parent=1 // pred_check_branch
      %14 = sbr.rel (0) target = $region5
    $region4: #{tpu_custom_call.1} parent=1 // pred_region
      %s16 = ssub.s32 128, 128
      %17 = vsyncadd [#allocation3], %s16
      %s19 = sshll.u32 [#allocation2], 4
      %s20 = int_to_ptr.vmem [resolvable:$true] %s19
      %22 = dma.hbm_to_vmem [thread:$0]  %s0, 128, %s20, [#allocation3]
    $region5: #{tpu_custom_call.1} parent=1 // pred_fallthru
      _
    // Predicated region
    $region6: #{tpu_custom_call.1} parent=1 // pred_check
      _
    $region7: #{tpu_custom_call.1} parent=1 // pred_check_branch
      %24 = sbr.rel (0) target = $region9
    $region8: #{tpu_custom_call.1} parent=1 // pred_region
      %s26 = ssub.s32 256, 256
      %27 = vsyncadd [#allocation6], %s26
      %s28 = sshll.u32 [#allocation5], 4
      %s29 = int_to_ptr.vmem [resolvable:$true] %s28
      %34 = dma.hbm_to_vmem [thread:$0]  %s1, 256, %s29, [#allocation6], 64, 64, 4
    $region9: #{tpu_custom_call.1} parent=1 // pred_fallthru
      _
    // Predicated region
    $region10: #{tpu_custom_call.1} parent=1 // pred_check
      _
    $region11: #{tpu_custom_call.1} parent=1 // pred_check_branch
      %36 = sbr.rel (0) target = $region13
    $region12: #{tpu_custom_call.1} parent=1 // pred_region
      _
    $region13: #{tpu_custom_call.1} parent=1 // pred_fallthru
      _
    // Predicated region
    $region14: #{tpu_custom_call.1} parent=1 // pred_check
      _
    $region15: #{tpu_custom_call.1} parent=1 // pred_check_branch
      %38 = sbr.rel (0) target = $region17
    $region16: #{tpu_custom_call.1} parent=1 // pred_region
      %s40 = ssub.s32 1024, 1024
      %41 = vsyncadd [#allocation6], %s40
      %s42 = sshll.u32 [#allocation7], 4
      %s43 = int_to_ptr.vmem [resolvable:$true] %s42
      %48 = dma.hbm_to_vmem [thread:$0]  %s3, 1024, %s43, [#allocation6], 64, 64, 4
    $region17: #{tpu_custom_call.1} parent=1 // pred_fallthru
      _
    // Predicated region
    $region18: #{tpu_custom_call.1} parent=1 // pred_check
      _
    $region19: #{tpu_custom_call.1} parent=1 // pred_check_branch
      %50 = sbr.rel (0) target = $region21
    $region20: #{tpu_custom_call.1} parent=1 // pred_region
      _
    $region21: #{tpu_custom_call.1} parent=1 // pred_fallthru
      _
    // Predicated region
    $region22: #{tpu_custom_call.1} parent=1 // pred_check
      _
    $region23: #{tpu_custom_call.1} parent=1 // pred_check_branch
      %52 = sbr.rel (0) target = $region25
    $region24: #{tpu_custom_call.1} parent=1 // pred_region
      %53 = dma.done [#allocation3], 128
    $region25: #{tpu_custom_call.1} parent=1 // pred_fallthru
      _
    // Predicated region
    $region26: #{tpu_custom_call.1} parent=1 // pred_check
      _
    $region27: #{tpu_custom_call.1} parent=1 // pred_check_branch
      %55 = sbr.rel (0) target = $region29
    $region28: #{tpu_custom_call.1} parent=1 // pred_region
      %56 = dma.done [#allocation6], 256
    $region29: #{tpu_custom_call.1} parent=1 // pred_fallthru
      _
    // Predicated region
    $region30: #{tpu_custom_call.1} parent=1 // pred_check
      _
    $region31: #{tpu_custom_call.1} parent=1 // pred_check_branch
      %58 = sbr.rel (0) target = $region33
    $region32: #{tpu_custom_call.1} parent=1 // pred_region
      %59 = dma.done [#allocation6], 1024
    $region33: #{tpu_custom_call.1} parent=1 // pred_fallthru
      _
    %v61 = vld [vmem:[#allocation2] sm:$0xff]
    %v62 = vpack.c.bf16 %v61, %v61
    %v63 = vld [vmem:[#allocation5] sm:$0xf]
    %v64 = vld [vmem:[#allocation5 + $0x4] sm:$0xf]
    %v65 = vld [vmem:[#allocation5 + $0x8] sm:$0xf]
    %v66 = vld [vmem:[#allocation5 + $0xc] sm:$0xf]
    %v67 = vld [vmem:[%s2] sm:$0x1]
    %v69 = vlaneseq
    %v70 = vshrl.u32 %v69, 7
    %v71 = vsub.s32 0, %v70
    %v72 = vrot.slane %v67, %v71
    %v78 = vunpack.c.l.b16 %v63
    %v79 = vunpack.c.l.b16 %v64
    %v80 = vunpack.c.l.b16 %v65
    %v81 = vunpack.c.l.b16 %v66
    %v82 = vpack.c.b16 %v79, %v78
    %v83 = vpack.c.b16 %v81, %v80
    %vm86 = vcmask 261120
    %v88 = vsel %vm86, %v62, 0
    %90 = vmatprep.subr.bf16.mxu0 0
    %91 = vmatpush1.bf16.msra.mxu0 %v82
    %92 = vmatprep.subr.bf16.mxu0 0
    %93 = vmatpush1.bf16.msra.mxu0 %v83
    %94 = vmatprep.subr.bf16.mxu0 0
    %95 = vmatpush1.bf16.msra.mxu0 0
    %96 = vmatprep.subr.bf16.mxu0 0
    %97 = vmatpush1.bf16.msra.mxu0 0
    %98 = vmatprep.subr.bf16.mxu0 0
    %99 = vmatpush1.bf16.msra.mxu0 0
    %100 = vmatprep.subr.bf16.mxu0 0
    %101 = vmatpush1.bf16.msra.mxu0 0
    %102 = vmatprep.subr.bf16.mxu0 0
    %103 = vmatpush1.bf16.msra.mxu0 0
    %104 = vmatprep.subr.bf16.mxu0 0
    %105 = vmatpush1.bf16.msra.mxu0 0
    %106 = vmatprep.subr.bf16.mxu0 0
    %107 = vmatpush1.bf16.msra.mxu0 0
    %108 = vmatprep.subr.bf16.mxu0 0
    %109 = vmatpush1.bf16.msra.mxu0 0
    %110 = vmatprep.subr.bf16.mxu0 0
    %111 = vmatpush1.bf16.msra.mxu0 0
    %112 = vmatprep.subr.bf16.mxu0 0
    %113 = vmatpush1.bf16.msra.mxu0 0
    %114 = vmatprep.subr.bf16.mxu0 0
    %115 = vmatpush1.bf16.msra.mxu0 0
    %116 = vmatprep.subr.bf16.mxu0 0
    %117 = vmatpush1.bf16.msra.mxu0 0
    %118 = vmatprep.subr.bf16.mxu0 0
    %119 = vmatpush1.bf16.msra.mxu0 0
    %120 = vmatprep.subr.bf16.mxu0 0
    %121 = vmatpush1.bf16.msra.mxu0 0
    %122 = vmatprep.mubr.bf16.mxu0 0
    %123 = vmatmul.mubr.bf16.gmra.mrb[0].mxu0 %v88
    %v124 = vpop.f32.mrb[0].mxu0
    %v125 = vadd.f32 %v72, %v124
    %v126 = vpop.f32.mrb[0].mxu0
    %v127 = vpop.f32.mrb[0].mxu0
    %v128 = vpop.f32.mrb[0].mxu0
    %129 = vdwg.mxu0
    %v130 = vmul.f32 %v125, 0.5
    %v131 = vtanh.pop %v130
    %v132 = vmul.f32 %v131, 0.5
    %v133 = vadd.f32 %v132, 0.5
    %v134 = vpack.c.bf16 %v133, %v133
    %v135 = vld [vmem:[#allocation7] sm:$0xf]
    %v136 = vld [vmem:[#allocation7 + $0x4] sm:$0xf]
    %v137 = vld [vmem:[#allocation7 + $0x8] sm:$0xf]
    %v138 = vld [vmem:[#allocation7 + $0xc] sm:$0xf]
    %v139 = vld [vmem:[#allocation7 + $0x10] sm:$0xf]
    %v140 = vld [vmem:[#allocation7 + $0x14] sm:$0xf]
    %v141 = vld [vmem:[#allocation7 + $0x18] sm:$0xf]
    %v142 = vld [vmem:[#allocation7 + $0x1c] sm:$0xf]
    %v143 = vld [vmem:[#allocation7 + $0x20] sm:$0xf]
    %v144 = vld [vmem:[#allocation7 + $0x24] sm:$0xf]
    %v145 = vld [vmem:[#allocation7 + $0x28] sm:$0xf]
    %v146 = vld [vmem:[#allocation7 + $0x2c] sm:$0xf]
    %v147 = vld [vmem:[#allocation7 + $0x30] sm:$0xf]
    %v148 = vld [vmem:[#allocation7 + $0x34] sm:$0xf]
    %v149 = vld [vmem:[#allocation7 + $0x38] sm:$0xf]
    %v150 = vld [vmem:[#allocation7 + $0x3c] sm:$0xf]
    %v151 = vld [vmem:[%s4] sm:$0x1]
    %v153 = vlaneseq
    %v154 = vshrl.u32 %v153, 7
    %v155 = vsub.s32 0, %v154
    %v156 = vrot.slane %v151, %v155
    %v174 = vunpack.c.l.b16 %v135
    %v175 = vunpack.c.l.b16 %v136
    %v176 = vunpack.c.l.b16 %v137
    %v177 = vunpack.c.l.b16 %v138
    %v178 = vunpack.c.l.b16 %v139
    %v179 = vunpack.c.l.b16 %v140
    %v180 = vunpack.c.l.b16 %v141
    %v181 = vunpack.c.l.b16 %v142
    %v182 = vunpack.c.l.b16 %v143
    %v183 = vunpack.c.l.b16 %v144
    %v184 = vunpack.c.l.b16 %v145
    %v185 = vunpack.c.l.b16 %v146
    %v186 = vunpack.c.l.b16 %v147
    %v187 = vunpack.c.l.b16 %v148
    %v188 = vunpack.c.l.b16 %v149
    %v189 = vunpack.c.l.b16 %v150
    %v190 = vpack.c.b16 %v175, %v174
    %v191 = vpack.c.b16 %v177, %v176
    %v192 = vpack.c.b16 %v179, %v178
    %v193 = vpack.c.b16 %v181, %v180
    %v194 = vpack.c.b16 %v183, %v182
    %v195 = vpack.c.b16 %v185, %v184
    %v196 = vpack.c.b16 %v187, %v186
    %v197 = vpack.c.b16 %v189, %v188
    %206 = vmatprep.subr.bf16.mxu0 0
    %207 = vmatpush1.bf16.msra.mxu0 %v190
    %208 = vmatprep.subr.bf16.mxu0 0
    %209 = vmatpush1.bf16.msra.mxu0 %v191
    %210 = vmatprep.subr.bf16.mxu0 0
    %211 = vmatpush1.bf16.msra.mxu0 %v192
    %212 = vmatprep.subr.bf16.mxu0 0
    %213 = vmatpush1.bf16.msra.mxu0 %v193
    %214 = vmatprep.subr.bf16.mxu0 0
    %215 = vmatpush1.bf16.msra.mxu0 %v194
    %216 = vmatprep.subr.bf16.mxu0 0
    %217 = vmatpush1.bf16.msra.mxu0 %v195
    %218 = vmatprep.subr.bf16.mxu0 0
    %219 = vmatpush1.bf16.msra.mxu0 %v196
    %220 = vmatprep.subr.bf16.mxu0 0
    %221 = vmatpush1.bf16.msra.mxu0 %v197
    %222 = vmatprep.subr.bf16.mxu0 0
    %223 = vmatpush1.bf16.msra.mxu0 0
    %224 = vmatprep.subr.bf16.mxu0 0
    %225 = vmatpush1.bf16.msra.mxu0 0
    %226 = vmatprep.subr.bf16.mxu0 0
    %227 = vmatpush1.bf16.msra.mxu0 0
    %228 = vmatprep.subr.bf16.mxu0 0
    %229 = vmatpush1.bf16.msra.mxu0 0
    %230 = vmatprep.subr.bf16.mxu0 0
    %231 = vmatpush1.bf16.msra.mxu0 0
    %232 = vmatprep.subr.bf16.mxu0 0
    %233 = vmatpush1.bf16.msra.mxu0 0
    %234 = vmatprep.subr.bf16.mxu0 0
    %235 = vmatpush1.bf16.msra.mxu0 0
    %236 = vmatprep.subr.bf16.mxu0 0
    %237 = vmatpush1.bf16.msra.mxu0 0
    %238 = vmatprep.mubr.bf16.mxu0 0
    %239 = vmatmul.mubr.bf16.gmra.mrb[0].mxu0 %v134
    %v240 = vpop.f32.mrb[0].mxu0
    %v241 = vadd.f32 %v156, %v240
    %v242 = vpop.f32.mrb[0].mxu0
    %v243 = vpop.f32.mrb[0].mxu0
    %v244 = vpop.f32.mrb[0].mxu0
    %245 = vdwg.mxu0
    %246 = vmax.xlane.f32.xlu0 %v241
    %v247 = vpop.xlane.xlu0 %246
    %v248 = vsub.f32 %v241, %v247
    %v249 = vmul.f32 %v248, 1.442695
    %v250 = vpow.pop %v249
    %251 = vadd.xlane.f32.xlu0 %v250
    %v252 = vpop.xlane.xlu0 %251
    %v253 = vrcp.pop %v252
    %v254 = vmul.f32 %v250, %v253
    %255 = vst [vmem:[#allocation8] sm:$0xff] %v254
    // Predicated region
    $region34: #{tpu_custom_call.1} parent=1 // pred_check
      _
    $region35: #{tpu_custom_call.1} parent=1 // pred_check_branch
      %257 = sbr.rel (0) target = $region37
    $region36: #{tpu_custom_call.1} parent=1 // pred_region
      %s259 = ssub.s32 128, 128
      %260 = vsyncadd [#allocation4], %s259
      %s262 = sshll.u32 [#allocation8], 4
      %s263 = int_to_ptr.vmem [resolvable:$true] %s262
      %265 = dma.vmem_to_hbm [thread:$0]  %s263, 128, %s5, [#allocation4]
    $region37: #{tpu_custom_call.1} parent=1 // pred_fallthru
      _
    // Predicated region
    $region38: #{tpu_custom_call.1} parent=1 // pred_check
      _
    $region39: #{tpu_custom_call.1} parent=1 // pred_check_branch
      %267 = sbr.rel (0) target = $region41
    $region40: #{tpu_custom_call.1} parent=1 // pred_region
      %268 = dma.done [#allocation4], 128
    $region41: #{tpu_custom_call.1} parent=1 // pred_fallthru
      _
    %269 = vsyncpa [#allocation3], 1
    %270 = vsyncpa [#allocation6], 1
    %271 = vsyncpa [#allocation4], 1

</llo_original>
